<compile_context>
chip_gen: v7x
topology: tpu7x:2x2x1
jax: 0.10.0
libtpu: 0.0.40
codegen_flags: <defaults>
</compile_context>

<pallas_src>
import functools
import math

import jax
import jax.numpy as jnp
from jax.experimental import pallas as pl
from jax.experimental.pallas import tpu as pltpu

_LANES = 128
_TARGET_BLOCK_BYTES = 2 << 20  # ~2 MiB per streamed x block


def _mask_kernel(u_ref, mask_ref, *, keep_prob):
    """mask = bernoulli(keep_prob) * (1/keep_prob), from uniform randoms."""
    u = u_ref[...]  # (1, 1, H) float32 in [0, 1)
    scale = jnp.asarray(1.0 / keep_prob, dtype=jnp.float32)
    mask_ref[...] = jnp.where(u < keep_prob, scale, 0.0).astype(mask_ref.dtype)


def _apply_kernel(mask_ref, x_ref, o_ref):
    """out = mask * x; mask (tB,1,H) broadcasts over the seq axis of (tB,tS,H)."""
    o_ref[...] = (mask_ref[...] * x_ref[...]).astype(o_ref.dtype)


def _fold_factor(S, H):
    """Smallest f with (f*H) % 128 == 0 and S % f == 0 (1 if none / not needed)."""
    if H % _LANES == 0:
        return 1
    f = _LANES // math.gcd(H, _LANES)
    return f if (S % f == 0) else 1


def _pick_tiles(B, S, H, itemsize):
    """Choose (tB, tS) so each x block is ~_TARGET_BLOCK_BYTES."""
    row_bytes = max(1, H * itemsize)
    seq_bytes = S * row_bytes
    if seq_bytes <= _TARGET_BLOCK_BYTES:
        # Whole sequence fits: pack several batches per block.
        tS = S
        tB = max(1, min(B, _TARGET_BLOCK_BYTES // seq_bytes))
    else:
        # Stream one batch at a time in seq tiles (multiple of 8 rows).
        tB = 1
        rows = (_TARGET_BLOCK_BYTES // row_bytes) // 8 * 8
        tS = max(8, rows)
    return tB, tS


class RNNDrop:
    """JAX/Pallas equivalent of the PyTorch RNNDrop module."""

    def __init__(self, drop_prob):
        self.prob = float(drop_prob)
        self.mask = None  # (batch, 1, hidden), stored in the activation dtype

    def reset_mask(self, mask_dim, key=None, dtype=jnp.float32):
        """mask_dim: (batch, hidden). Builds bernoulli(1-p)/(1-p) mask."""
        B, H = mask_dim
        keep_prob = 1.0 - self.prob
        if key is None:
            key = jax.random.PRNGKey(0)
        # Uniform randoms from jax.random (portable); thresholding in-kernel.
        u = jax.random.uniform(key, (B, 1, H), dtype=jnp.float32)
        kern = functools.partial(_mask_kernel, keep_prob=keep_prob)
        self.mask = pl.pallas_call(
            kern,
            out_shape=jax.ShapeDtypeStruct((B, 1, H), dtype),
            grid=(B,),
            in_specs=[pl.BlockSpec((1, 1, H), lambda b: (b, 0, 0))],
            out_specs=pl.BlockSpec((1, 1, H), lambda b: (b, 0, 0)),
            compiler_params=pltpu.CompilerParams(
                dimension_semantics=("parallel",)
            ),
        )(u)

    def __call__(self, x):
        """x: (batch, seq, hidden). Returns mask * x (same mask every step)."""
        assert self.mask is not None, "call reset_mask() before forward"
        B, S, H = x.shape

        # Lane-density fold: make the last (lane) dim a multiple of 128.
        f = _fold_factor(S, H)
        if f > 1:
            S2, H2 = S // f, f * H
            x_in = x.reshape(B, S2, H2)                 # contiguous reshape
            mask_in = jnp.tile(self.mask, (1, 1, f))    # (B, 1, f*H), tiny
        else:
            S2, H2 = S, H
            x_in = x
            mask_in = self.mask

        tB, tS = _pick_tiles(B, S2, H2, x.dtype.itemsize)
        grid = (pl.cdiv(B, tB), pl.cdiv(S2, tS))

        out = pl.pallas_call(
            _apply_kernel,
            out_shape=jax.ShapeDtypeStruct((B, S2, H2), x.dtype),
            grid=grid,
            in_specs=[
                # mask tile: same block for every seq step -> VMEM-resident
                pl.BlockSpec((tB, 1, H2), lambda b, s: (b, 0, 0)),
                # streamed activation tile
                pl.BlockSpec((tB, tS, H2), lambda b, s: (b, s, 0)),
            ],
            out_specs=pl.BlockSpec((tB, tS, H2), lambda b, s: (b, s, 0)),
            compiler_params=pltpu.CompilerParams(
                # both axes independent -> shard across v7x's 2 TensorCores
                dimension_semantics=("parallel", "parallel"),
            ),
        )(mask_in, x_in)

        return out.reshape(B, S, H) if f > 1 else out


if __name__ == "__main__":
    # Small RNN-shaped example: batch=2, seq=8, hidden=32.
    # (hidden=32 also exercises the lane-density fold path: 4 steps folded ->
    #  128-lane blocks.)
    B, S, H = 2, 8, 32
    key = jax.random.PRNGKey(0)
    kx, km = jax.random.split(key)
    x = jax.random.normal(kx, (B, S, H), dtype=jnp.float32)

    drop = RNNDrop(drop_prob=0.3)
    drop.reset_mask((B, H), key=km, dtype=x.dtype)

    y = jax.block_until_ready(drop(x))

    # Sanity checks: mask elements are 0 or 1/(1-p); forward matches mask * x;
    # and the same dropout pattern is applied at every time step.
    keep_prob = 1.0 - drop.prob
    mask = jax.block_until_ready(drop.mask)
    assert mask.shape == (B, 1, H)
    scale_f32 = float(jnp.float32(1.0 / keep_prob))
    vals = set(float(v) for v in jnp.unique(mask))
    assert vals <= {0.0, scale_f32}, vals
    expected = mask * x
    assert y.shape == (B, S, H)
    assert jnp.allclose(y, expected, atol=1e-6), "forward mismatch"
    dropped = mask[:, 0, :] == 0.0
    assert bool(jnp.all(jnp.where(dropped[:, None, :], y == 0.0, True)))

    print("KERNEL_OK")
</pallas_src>

<mosaic_0001>
module attributes {stable_mosaic.version = 11 : i64} {
  func.func @_mask_kernel(%arg0: i32, %arg1: memref<1x1x32xf32, #tpu.memory_space<vmem>>, %arg2: memref<1x1x32xf32, #tpu.memory_space<vmem>>) attributes {dimension_semantics = [#tpu.dimension_semantics<parallel>], iteration_bounds = array<i64: 2>, scalar_prefetch = 0 : i64, scratch_operands = 0 : i64, tpu.core_type = #tpu.core_type<tc>, window_params = [{transform_indices = @transform_0, window_bounds = array<i64: 1, 1, 32>}, {transform_indices = @transform_1, window_bounds = array<i64: 1, 1, 32>}]} {
    %c0 = arith.constant 0 : index
    %c0_0 = arith.constant 0 : index
    %c0_1 = arith.constant 0 : index
    %0 = vector.load %arg1[%c0, %c0_0, %c0_1] : memref<1x1x32xf32, #tpu.memory_space<vmem>>, vector<1x1x32xf32>
    %cst = arith.constant 0.699999988 : f32
    %1 = vector.broadcast %cst : f32 to vector<1x1x32xf32>
    %2 = arith.cmpf olt, %0, %1 : vector<1x1x32xf32>
    %cst_2 = arith.constant 1.42857146 : f32
    %cst_3 = arith.constant 0.000000e+00 : f32
    %3 = vector.broadcast %cst_2 : f32 to vector<1x1x32xf32>
    %4 = vector.broadcast %cst_3 : f32 to vector<1x1x32xf32>
    %5 = arith.select %2, %3, %4 : vector<1x1x32xi1>, vector<1x1x32xf32>
    %c0_4 = arith.constant 0 : index
    %c0_5 = arith.constant 0 : index
    %c0_6 = arith.constant 0 : index
    %6 = vector.load %arg2[%c0_4, %c0_5, %c0_6] : memref<1x1x32xf32, #tpu.memory_space<vmem>>, vector<1x1x32xf32>
    tpu.vector_store %arg2[%c0_4, %c0_5, %c0_6], %5 {strides = array<i32>} : memref<1x1x32xf32, #tpu.memory_space<vmem>>, vector<1x1x32xf32>,
    return
  }
  func.func @transform_0(%arg0: i32) -> (i32, i32, i32) {
    %c0_i32 = arith.constant 0 : i32
    %c0_i32_0 = arith.constant 0 : i32
    %c0_i32_1 = arith.constant 0 : i32
    return %arg0, %c0_i32, %c0_i32_0 : i32, i32, i32
  }
  func.func @transform_1(%arg0: i32) -> (i32, i32, i32) {
    %c0_i32 = arith.constant 0 : i32
    %c0_i32_0 = arith.constant 0 : i32
    %c0_i32_1 = arith.constant 0 : i32
    return %arg0, %c0_i32, %c0_i32_0 : i32, i32, i32
  }
}

</mosaic_0001>

<llo_original>
// kernel: tpu_custom_call.1
$region0: #{tpu_custom_call.1}
  #allocation0 [shape = 'u32[]', space=smem, size = 0x4, offset = 0x4, fixed_abs, tag = 'smem constant byte address 0x4 - core index']
  #allocation1 [shape = 'u32[144,128]{1,0:T(1,128)}', space=vmem, size = 0x12000, scoped, tag = 'internal scratch']
  %s0 = inlined_call_operand.hbm [shape: f32[2,1,32], index: 0, kind: input, shape index: {}]
  %s1 = inlined_call_operand.hbm [shape: f32[2,1,32], index: 1, kind: output, shape index: {}]
  %s2 = sld [smem:[#allocation0]]
  $region41: #{tpu_custom_call.1} parent=0
    _
  %s4 = ssub.s32 1, %s2
  %s5 = scalar_select 0, %s4, %s2
  $region1: #{tpu_custom_call.1} parent=0
    #allocation2 [shape = 'u8[1024]{0}', space=vmem, size = 0x400, scoped, tag = 'input window, operand 0']
    #allocation3 [shape = 's32[2]{0}', space=sflag, size = 0x8, scoped, tag = 'scoped memory for tpu_custom_call.1']
    #allocation4 [shape = 's32[2]{0}', space=sflag, size = 0x8, scoped, tag = 'scoped memory for tpu_custom_call.1']
    #allocation5 [shape = 'u8[1024]{0}', space=vmem, size = 0x400, scoped, tag = 'output window, operand 0']
    %6 = vsyncpa [#allocation3], 0
    %s7 = scalar_lea.sflag [#allocation3], 1
    %8 = vsyncpa %s7, 0
    %9 = vsyncpa [#allocation4], 0
    %s10 = scalar_lea.sflag [#allocation4], 1
    %11 = vsyncpa %s10, 0
    loop: start=0, step=1, limit=4
    $region2: #{tpu_custom_call.1} parent=1 // loop_pre_header
      _
    $region3: #{tpu_custom_call.1} parent=1 // loop_header
      %s13 = sphi 0, %s17
      %p14 = scmp.ge.s32.totalorder %s13, 4
      %s23 = sphi 0, %s25
      %s26 = sphi 0, %s23
      %s27 = sphi 0, %s26
      %s43 = sphi 0, %s27
      %s49 = sphi 0, %s51
      %s52 = sphi 0, %s49
      %s53 = sphi 0, %s52
      %s69 = sphi 0, %s53
    $region4: #{tpu_custom_call.1} parent=1 // loop_header_branch
      %16 = sbr.rel (%p14) target = $region8
    $region5: #{tpu_custom_call.1} parent=1 // loop_body
      %s18 = ssub.s32 %s13, 1
      %s19 = ssub.s32 %s13, 2
      %s20 = sadd.s32 %s13, 1
      %s21 = ssub.s32 %s13, %s20
      %p22 = scmp.eq.s32.totalorder %s21, 0
      %s24 = sadd.s32 %s23, 1
      %s25 = scalar_select %p22, %s23, %s24
      %p28 = pneg %p22
      %p29 = scmp.eq.s32.totalorder %s13, 1
      %p30 = por %p28, %p29
      %p31 = scmp.ne.s32.totalorder %s23, %s26
      %p32 = scmp.eq.s32.totalorder %s13, 0
      %p33 = por %p31, %p32
      %p34 = scmp.ne.s32.totalorder %s23, %s26
      %p35 = scmp.eq.s32.totalorder %s18, 1
      %p36 = por %p34, %p35
      %p37 = scmp.ne.s32.totalorder %s26, %s27
      %p38 = scmp.eq.s32.totalorder %s18, 0
      %p39 = por %p37, %p38
      %p40 = scmp.ne.s32.totalorder %s26, %s27
      %p41 = scmp.eq.s32.totalorder %s19, 1
      %p42 = por %p40, %p41
      %p44 = scmp.ne.s32.totalorder %s27, %s43
      %p45 = scmp.eq.s32.totalorder %s19, 0
      %p46 = por %p44, %p45
      %s47 = ssub.s32 %s13, %s20
      %p48 = scmp.eq.s32.totalorder %s47, 0
      %s50 = sadd.s32 %s49, 1
      %s51 = scalar_select %p48, %s49, %s50
      %p54 = pneg %p48
      %p55 = scmp.eq.s32.totalorder %s13, 1
      %p56 = por %p54, %p55
      %p57 = scmp.ne.s32.totalorder %s49, %s52
      %p58 = scmp.eq.s32.totalorder %s13, 0
      %p59 = por %p57, %p58
      %p60 = scmp.ne.s32.totalorder %s49, %s52
      %p61 = scmp.eq.s32.totalorder %s18, 1
      %p62 = por %p60, %p61
      %p63 = scmp.ne.s32.totalorder %s52, %s53
      %p64 = scmp.eq.s32.totalorder %s18, 0
      %p65 = por %p63, %p64
      %p66 = scmp.ne.s32.totalorder %s52, %s53
      %p67 = scmp.eq.s32.totalorder %s19, 1
      %p68 = por %p66, %p67
      %p70 = scmp.ne.s32.totalorder %s53, %s69
      %p71 = scmp.eq.s32.totalorder %s19, 0
      %p72 = por %p70, %p71
      %p73 = scmp.le.s32.totalorder 1, %s13
      %p74 = scmp.lt.s32.totalorder %s13, 3
      %p75 = pnand %p73, %p74
      %p76 = pneg %p75
      // Predicated region
      $region9: #{tpu_custom_call.1} parent=5 // pred_check
        _
      $region10: #{tpu_custom_call.1} parent=5 // pred_check_branch
        %78 = sbr.rel (%p75) target = $region12
      $region11: #{tpu_custom_call.1} parent=5 // pred_region
        %s79 = ssub.s32 %s13, 1
      $region12: #{tpu_custom_call.1} parent=5 // pred_fallthru
        _
      %p80 = scmp.lt.s32.totalorder %s13, 2
      // Predicated region
      $region13: #{tpu_custom_call.1} parent=5 // pred_check
        %p81 = pneg %p80
      $region14: #{tpu_custom_call.1} parent=5 // pred_check_branch
        %83 = sbr.rel (%p81) target = $region16
      $region15: #{tpu_custom_call.1} parent=5 // pred_region
        // Predicated region
        $region17: #{tpu_custom_call.1} parent=15 // pred_check
          %p84 = pneg %p33
        $region18: #{tpu_custom_call.1} parent=15 // pred_check_branch
          %86 = sbr.rel (%p84) target = $region20
        $region19: #{tpu_custom_call.1} parent=15 // pred_region
          %s87 = sand.u32 %s23, 1
          %s88 = scalar_lea.sflag [#allocation3], %s87
          %s89 = sand.u32 %s23, 1
          %s90 = scalar_lea.vmem [#allocation2], %s89
          %s92 = ssub.s32 16, 16
          %93 = vsyncadd %s88, %s92
          %s94 = smul.addr %s13, 16
          %s95 = scalar_lea.hbm %s0, %s94
          %s97 = sshll.u32 %s90, 4
          %s98 = int_to_ptr.vmem [resolvable:$true] %s97
          %100 = dma.hbm_to_vmem [thread:$0]  %s95, 16, %s98, %s88
        $region20: #{tpu_custom_call.1} parent=15 // pred_fallthru
          _
      $region16: #{tpu_custom_call.1} parent=5 // pred_fallthru
        _
      %p101 = scmp.le.s32.totalorder 1, %s13
      %p102 = scmp.lt.s32.totalorder %s13, 3
      %p103 = pnand %p101, %p102
      %p104 = pneg %p103
      // Predicated region
      $region21: #{tpu_custom_call.1} parent=5 // pred_check
        _
      $region22: #{tpu_custom_call.1} parent=5 // pred_check_branch
        %106 = sbr.rel (%p103) target = $region24
      $region23: #{tpu_custom_call.1} parent=5 // pred_region
        %s107 = ssub.s32 %s13, 1
        %s108 = sand.u32 %s26, 1
        %s109 = scalar_lea.sflag [#allocation3], %s108
        %s110 = sand.u32 %s26, 1
        %s111 = scalar_lea.vmem [#allocation2], %s110
        // Predicated region
        $region25: #{tpu_custom_call.1} parent=23 // pred_check
          %p112 = pneg %p39
        $region26: #{tpu_custom_call.1} parent=23 // pred_check_branch
          %114 = sbr.rel (%p112) target = $region28
        $region27: #{tpu_custom_call.1} parent=23 // pred_region
          %115 = dma.done %s109, 16
        $region28: #{tpu_custom_call.1} parent=23 // pred_fallthru
          _
        %s116 = sand.u32 %s26, 1
        %s117 = scalar_lea.sflag [#allocation3], %s116
        %s118 = sand.u32 %s26, 1
        %s119 = scalar_lea.vmem [#allocation2], %s118
        %p120 = pneg %p39
        %p121 = pneg %p36
        %p122 = pneg %p65
        %p123 = pneg %p62
        %s124 = sand.u32 %s52, 1
        %s125 = scalar_lea.sflag [#allocation4], %s124
        %s126 = sand.u32 %s52, 1
        %s127 = scalar_lea.vmem [#allocation5], %s126
        %v128 = vld [vmem:[%s111] sm:$0x1]
        %vm129 = vcmp.lt.f32.partialorder %v128, 0.7
        %v130 = vsel %vm129, 1.4285715, 0.0
        %vm131 = vcmask 253952
        %132 = vst.msk [vmem:[%s127] sm:$0x1] %vm131, %v130
        %s133 = sand.u32 %s52, 1
        %s134 = scalar_lea.sflag [#allocation4], %s133
        %s135 = sand.u32 %s52, 1
        %s136 = scalar_lea.vmem [#allocation5], %s135
        // Predicated region
        $region29: #{tpu_custom_call.1} parent=23 // pred_check
          %p137 = pneg %p62
        $region30: #{tpu_custom_call.1} parent=23 // pred_check_branch
          %139 = sbr.rel (%p137) target = $region32
        $region31: #{tpu_custom_call.1} parent=23 // pred_region
          %s141 = ssub.s32 16, 16
          %142 = vsyncadd %s134, %s141
          %s143 = smul.addr %s18, 16
          %s144 = scalar_lea.hbm %s1, %s143
          %s146 = sshll.u32 %s136, 4
          %s147 = int_to_ptr.vmem [resolvable:$true] %s146
          %149 = dma.vmem_to_hbm [thread:$0]  %s147, 16, %s144, %s134
        $region32: #{tpu_custom_call.1} parent=23 // pred_fallthru
          _
      $region24: #{tpu_custom_call.1} parent=5 // pred_fallthru
        _
      %p150 = scmp.le.s32.totalorder 2, %s13
      // Predicated region
      $region33: #{tpu_custom_call.1} parent=5 // pred_check
        %p151 = pneg %p150
      $region34: #{tpu_custom_call.1} parent=5 // pred_check_branch
        %153 = sbr.rel (%p151) target = $region36
      $region35: #{tpu_custom_call.1} parent=5 // pred_region
        %s154 = ssub.s32 %s13, 2
        // Predicated region
        $region37: #{tpu_custom_call.1} parent=35 // pred_check
          %p155 = pneg %p68
        $region38: #{tpu_custom_call.1} parent=35 // pred_check_branch
          %157 = sbr.rel (%p155) target = $region40
        $region39: #{tpu_custom_call.1} parent=35 // pred_region
          %s158 = sand.u32 %s53, 1
          %s159 = scalar_lea.sflag [#allocation4], %s158
          %s160 = sand.u32 %s53, 1
          %s161 = scalar_lea.vmem [#allocation5], %s160
          %162 = dma.done %s159, 16
        $region40: #{tpu_custom_call.1} parent=35 // pred_fallthru
          _
      $region36: #{tpu_custom_call.1} parent=5 // pred_fallthru
        _
    $region6: #{tpu_custom_call.1} parent=1 // loop_footer
      %s17 = sadd.s32 1, %s13
    $region7: #{tpu_custom_call.1} parent=1 // loop_footer_branch
      %12 = sbr.rel target = $region3
    $region8: #{tpu_custom_call.1} parent=1 // loop_exit
      _
    %163 = vsyncpa [#allocation3], 1
    %s164 = scalar_lea.sflag [#allocation3], 1
    %165 = vsyncpa %s164, 1
    %166 = vsyncpa [#allocation4], 1
    %s167 = scalar_lea.sflag [#allocation4], 1
    %168 = vsyncpa %s167, 1

</llo_original>
